<compile_context>
chip_gen: v5e
topology: v5e:2x2
jax: 0.10.0
libtpu: 0.0.40
codegen_flags: <defaults>
</compile_context>

<pallas_src>
import functools

import jax
import jax.numpy as jnp
from jax.experimental import pallas as pl
from jax.experimental.pallas import tpu as pltpu


def autoencoder_kernel(x_ref, we_ref, be_ref, wd_ref, bd_ref, enc_ref, dec_ref):
    # Encoder: [TB, D_in](bf16) @ [D_in, D_bn](bf16) -> f32 acc, f32 bias add.
    enc_f32 = jnp.dot(x_ref[...], we_ref[...],
                      preferred_element_type=jnp.float32) + be_ref[...]
    enc_ref[...] = enc_f32.astype(enc_ref.dtype)
    # Decoder: cast the (un-rounded) f32 activation to bf16 for the MXU,
    # accumulate in f32, f32 bias add, store in output dtype.
    dec_f32 = jnp.dot(enc_f32.astype(wd_ref.dtype), wd_ref[...],
                      preferred_element_type=jnp.float32) + bd_ref[...]
    dec_ref[...] = dec_f32.astype(dec_ref.dtype)


@functools.partial(jax.jit, static_argnames=("max_tile_b", "compute_dtype"))
def autoencoder_forward(x, w_enc, b_enc, w_dec, b_dec, *,
                        max_tile_b=256, compute_dtype=jnp.bfloat16):
    """x: [B, D_in]; w_enc: [D_in, D_bn]; b_enc: [D_bn];
       w_dec: [D_bn, D_in]; b_dec: [D_in].  Returns (encoded, decoded)."""
    B, D_in = x.shape
    D_bn = w_enc.shape[1]
    out_dtype = x.dtype
    out_bytes = jnp.dtype(out_dtype).itemsize
    cmp_bytes = jnp.dtype(compute_dtype).itemsize

    # Batch tile: multiple of 8 sublanes, capped at 256 (fills v6e/v7x MXU rows).
    b_rounded = ((B + 7) // 8) * 8
    tile_b = min(max_tile_b, max(8, b_rounded))
    B_pad = ((B + tile_b - 1) // tile_b) * tile_b
    if B_pad != B:
        x = jnp.pad(x, ((0, B_pad - B), (0, 0)))

    # bf16 matmul inputs (halves x/weight DMA bytes), f32 biases.
    xb = x.astype(compute_dtype)
    we = w_enc.astype(compute_dtype)
    wd = w_dec.astype(compute_dtype)
    be = b_enc.reshape(1, D_bn).astype(jnp.float32)
    bd = b_dec.reshape(1, D_in).astype(jnp.float32)

    grid = (B_pad // tile_b,)

    cost = pl.CostEstimate(
        flops=4 * B_pad * D_in * D_bn,            # two matmuls: 2*M*N*K each
        transcendentals=0,
        bytes_accessed=(B_pad * D_in * cmp_bytes          # x
                        + 2 * D_in * D_bn * cmp_bytes     # w_enc + w_dec
                        + (D_bn + D_in) * 4               # biases (f32)
                        + B_pad * D_bn * out_bytes        # encoded
                        + B_pad * D_in * out_bytes))      # decoded

    encoded, decoded = pl.pallas_call(
        autoencoder_kernel,
        out_shape=(
            jax.ShapeDtypeStruct((B_pad, D_bn), out_dtype),
            jax.ShapeDtypeStruct((B_pad, D_in), out_dtype),
        ),
        grid=grid,
        in_specs=[
            pl.BlockSpec((tile_b, D_in), lambda i: (i, 0)),   # x: tiled over batch
            pl.BlockSpec((D_in, D_bn), lambda i: (0, 0)),     # w_enc: VMEM-resident
            pl.BlockSpec((1, D_bn), lambda i: (0, 0)),        # b_enc: VMEM-resident
            pl.BlockSpec((D_bn, D_in), lambda i: (0, 0)),     # w_dec: VMEM-resident
            pl.BlockSpec((1, D_in), lambda i: (0, 0)),        # b_dec: VMEM-resident
        ],
        out_specs=(
            pl.BlockSpec((tile_b, D_bn), lambda i: (i, 0)),
            pl.BlockSpec((tile_b, D_in), lambda i: (i, 0)),
        ),
        compiler_params=pltpu.CompilerParams(
            dimension_semantics=("parallel",),
        ),
        cost_estimate=cost,
    )(xb, we, be, wd, bd)

    if B_pad != B:
        encoded = encoded[:B]
        decoded = decoded[:B]
    return encoded, decoded


def _jax_reference(x, w_enc, b_enc, w_dec, b_dec, dtype):
    """Plain-JAX reference using the same bf16-input / f32-accumulate recipe."""
    enc = jnp.dot(x.astype(dtype), w_enc.astype(dtype),
                  preferred_element_type=jnp.float32) + b_enc
    dec = jnp.dot(enc.astype(dtype), w_dec.astype(dtype),
                  preferred_element_type=jnp.float32) + b_dec
    return enc, dec


if __name__ == "__main__":
    # Shapes consistent with the module: input_dim=256, bottleneck_dim=128.
    D_IN, D_BN = 256, 128

    key = jax.random.PRNGKey(0)
    kx, kwe, kbe, kwd, kbd, kx2 = jax.random.split(key, 6)

    # PyTorch Linear init bounds; weights kept in the [in, out] (transposed) layout.
    bound_e = 1.0 / jnp.sqrt(D_IN)
    bound_d = 1.0 / jnp.sqrt(D_BN)
    w_enc = jax.random.uniform(kwe, (D_IN, D_BN), jnp.float32, -bound_e, bound_e)
    b_enc = jax.random.uniform(kbe, (D_BN,), jnp.float32, -bound_e, bound_e)
    w_dec = jax.random.uniform(kwd, (D_BN, D_IN), jnp.float32, -bound_d, bound_d)
    b_dec = jax.random.uniform(kbd, (D_IN,), jnp.float32, -bound_d, bound_d)

    ok = True
    # Case 1: tiny batch (single grid step).  Case 2: batch that exercises the
    # multi-step grid + padding path (grid=(2,), tile_b=256, pad 300 -> 512).
    for B, kxi in ((8, kx), (300, kx2)):
        x = jax.random.normal(kxi, (B, D_IN), dtype=jnp.float32)

        encoded, decoded = autoencoder_forward(x, w_enc, b_enc, w_dec, b_dec)
        jax.block_until_ready((encoded, decoded))

        assert encoded.shape == (B, D_BN) and decoded.shape == (B, D_IN)

        # Reference with matching bf16-input recipe (tight tolerance).
        enc_bf, dec_bf = _jax_reference(x, w_enc, b_enc, w_dec, b_dec, jnp.bfloat16)
        ok &= bool(jnp.allclose(encoded, enc_bf, atol=1e-2, rtol=1e-2))
        ok &= bool(jnp.allclose(decoded, dec_bf, atol=1e-2, rtol=1e-2))

        # Pure f32 PyTorch-semantics reference (loose tolerance for bf16 inputs).
        enc_f32 = x @ w_enc + b_enc
        dec_f32 = enc_f32 @ w_dec + b_dec
        ok &= bool(jnp.allclose(encoded, enc_f32, atol=5e-2, rtol=5e-2))
        ok &= bool(jnp.allclose(decoded, dec_f32, atol=5e-2, rtol=5e-2))

    assert ok, "Pallas autoencoder output mismatch vs JAX reference"
    print("KERNEL_OK")
</pallas_src>

<mosaic_0001>
module attributes {stable_mosaic.version = 11 : i64} {
  func.func @autoencoder_kernel(%arg0: i32, %arg1: memref<8x256xbf16, #tpu.memory_space<vmem>>, %arg2: memref<256x128xbf16, #tpu.memory_space<vmem>>, %arg3: memref<1x128xf32, #tpu.memory_space<vmem>>, %arg4: memref<128x256xbf16, #tpu.memory_space<vmem>>, %arg5: memref<1x256xf32, #tpu.memory_space<vmem>>, %arg6: memref<8x128xf32, #tpu.memory_space<vmem>>, %arg7: memref<8x256xf32, #tpu.memory_space<vmem>>) attributes {dimension_semantics = [#tpu.dimension_semantics<parallel>], iteration_bounds = array<i64: 1>, scalar_prefetch = 0 : i64, scratch_operands = 0 : i64, tpu.core_type = #tpu.core_type<tc>, window_params = [{transform_indices = @transform_0, window_bounds = array<i64: 8, 256>}, {pipeline_mode = #tpu.pipeline_mode<synchronous>, transform_indices = @transform_1, window_bounds = array<i64: 256, 128>}, {pipeline_mode = #tpu.pipeline_mode<synchronous>, transform_indices = @transform_2, window_bounds = array<i64: 1, 128>}, {pipeline_mode = #tpu.pipeline_mode<synchronous>, transform_indices = @transform_3, window_bounds = array<i64: 128, 256>}, {pipeline_mode = #tpu.pipeline_mode<synchronous>, transform_indices = @transform_4, window_bounds = array<i64: 1, 256>}, {transform_indices = @transform_5, window_bounds = array<i64: 8, 128>}, {transform_indices = @transform_6, window_bounds = array<i64: 8, 256>}]} {
    %c0 = arith.constant 0 : index
    %c0_0 = arith.constant 0 : index
    %0 = vector.load %arg1[%c0, %c0_0] : memref<8x256xbf16, #tpu.memory_space<vmem>>, vector<8x256xbf16>
    %c0_1 = arith.constant 0 : index
    %c0_2 = arith.constant 0 : index
    %1 = vector.load %arg2[%c0_1, %c0_2] : memref<256x128xbf16, #tpu.memory_space<vmem>>, vector<256x128xbf16>
    %cst = arith.constant dense<0.000000e+00> : vector<8x128xf32>
    %2 = tpu.matmul %0, %1, %cst {dimension_numbers = #tpu.dot_dimension_numbers<[1], [0], [0], [1], [0, 0, 1, 1], [], []>} : vector<8x256xbf16>, vector<256x128xbf16>, vector<8x128xf32> -> vector<8x128xf32>
    %c0_3 = arith.constant 0 : index
    %c0_4 = arith.constant 0 : index
    %3 = vector.load %arg3[%c0_3, %c0_4] : memref<1x128xf32, #tpu.memory_space<vmem>>, vector<1x128xf32>
    %4 = vector.broadcast %3 : vector<1x128xf32> to vector<8x128xf32>
    %5 = arith.addf %2, %4 : vector<8x128xf32>
    %c0_5 = arith.constant 0 : index
    %c0_6 = arith.constant 0 : index
    %6 = vector.load %arg6[%c0_5, %c0_6] : memref<8x128xf32, #tpu.memory_space<vmem>>, vector<8x128xf32>
    tpu.vector_store %arg6[%c0_5, %c0_6], %5 {strides = array<i32>} : memref<8x128xf32, #tpu.memory_space<vmem>>, vector<8x128xf32>,
    %7 = arith.truncf %5 : vector<8x128xf32> to vector<8x128xbf16>
    %c0_7 = arith.constant 0 : index
    %c0_8 = arith.constant 0 : index
    %8 = vector.load %arg4[%c0_7, %c0_8] : memref<128x256xbf16, #tpu.memory_space<vmem>>, vector<128x256xbf16>
    %cst_9 = arith.constant dense<0.000000e+00> : vector<8x256xf32>
    %9 = tpu.matmul %7, %8, %cst_9 {dimension_numbers = #tpu.dot_dimension_numbers<[1], [0], [0], [1], [0, 0, 1, 1], [], []>} : vector<8x128xbf16>, vector<128x256xbf16>, vector<8x256xf32> -> vector<8x256xf32>
    %c0_10 = arith.constant 0 : index
    %c0_11 = arith.constant 0 : index
    %10 = vector.load %arg5[%c0_10, %c0_11] : memref<1x256xf32, #tpu.memory_space<vmem>>, vector<1x256xf32>
    %11 = vector.broadcast %10 : vector<1x256xf32> to vector<8x256xf32>
    %12 = arith.addf %9, %11 : vector<8x256xf32>
    %c0_12 = arith.constant 0 : index
    %c0_13 = arith.constant 0 : index
    %13 = vector.load %arg7[%c0_12, %c0_13] : memref<8x256xf32, #tpu.memory_space<vmem>>, vector<8x256xf32>
    tpu.vector_store %arg7[%c0_12, %c0_13], %12 {strides = array<i32>} : memref<8x256xf32, #tpu.memory_space<vmem>>, vector<8x256xf32>,
    return
  }
  func.func @transform_0(%arg0: i32) -> (i32, i32) {
    %c0_i32 = arith.constant 0 : i32
    %c0_i32_0 = arith.constant 0 : i32
    return %arg0, %c0_i32 : i32, i32
  }
  func.func @transform_1(%arg0: i32) -> (i32, i32) {
    %c0_i32 = arith.constant 0 : i32
    %c0_i32_0 = arith.constant 0 : i32
    %c0_i32_1 = arith.constant 0 : i32
    return %c0_i32, %c0_i32_0 : i32, i32
  }
  func.func @transform_2(%arg0: i32) -> (i32, i32) {
    %c0_i32 = arith.constant 0 : i32
    %c0_i32_0 = arith.constant 0 : i32
    %c0_i32_1 = arith.constant 0 : i32
    return %c0_i32, %c0_i32_0 : i32, i32
  }
  func.func @transform_3(%arg0: i32) -> (i32, i32) {
    %c0_i32 = arith.constant 0 : i32
    %c0_i32_0 = arith.constant 0 : i32
    %c0_i32_1 = arith.constant 0 : i32
    return %c0_i32, %c0_i32_0 : i32, i32
  }
  func.func @transform_4(%arg0: i32) -> (i32, i32) {
    %c0_i32 = arith.constant 0 : i32
    %c0_i32_0 = arith.constant 0 : i32
    %c0_i32_1 = arith.constant 0 : i32
    return %c0_i32, %c0_i32_0 : i32, i32
  }
  func.func @transform_5(%arg0: i32) -> (i32, i32) {
    %c0_i32 = arith.constant 0 : i32
    %c0_i32_0 = arith.constant 0 : i32
    return %arg0, %c0_i32 : i32, i32
  }
  func.func @transform_6(%arg0: i32) -> (i32, i32) {
    %c0_i32 = arith.constant 0 : i32
    %c0_i32_0 = arith.constant 0 : i32
    return %arg0, %c0_i32 : i32, i32
  }
}

</mosaic_0001>

<llo_original>
// kernel: autoencoder_forward.1
$region0: #{autoencoder_forward.1}
  #allocation0 [shape = 'u32[]', space=smem, size = 0x4, offset = 0x4, fixed_abs, tag = 'smem constant byte address 0x4 - core index']
  #allocation1 [shape = 'u32[72,128]{1,0:T(1,128)}', space=vmem, size = 0x9000, scoped, tag = 'internal scratch']
  %s0 = inlined_call_operand.vmem [shape: bf16[8,256], index: 0, kind: input, shape index: {}]
  %s1 = inlined_call_operand.vmem [shape: bf16[256,128], index: 1, kind: input, shape index: {}]
  %s2 = inlined_call_operand.vmem [shape: f32[1,128], index: 2, kind: input, shape index: {}]
  %s3 = inlined_call_operand.vmem [shape: bf16[128,256], index: 3, kind: input, shape index: {}]
  %s4 = inlined_call_operand.vmem [shape: f32[1,256], index: 4, kind: input, shape index: {}]
  %s5 = inlined_call_operand.hbm [shape: f32[8,128], index: 5, kind: output, shape index: {0}]
  %s6 = inlined_call_operand.hbm [shape: f32[8,256], index: 6, kind: output, shape index: {1}]
  %7 = xla_tuple %s5, %s6
  %s8 = sld [smem:[#allocation0]]
  $region38: #{autoencoder_forward.1} parent=0
    _
  %s10 = ssub.s32 1, %s8
  %s11 = scalar_select 0, %s10, %s8
  $region1: #{autoencoder_forward.1} parent=0
    #allocation2 [shape = 'u8[4096]{0}', space=vmem, size = 0x1000, scoped, tag = 'output window, operand 0, single buffered']
    #allocation3 [shape = 's32[1]{0}', space=sflag, size = 0x4, scoped, tag = 'scoped memory for autoencoder_forward.1']
    #allocation4 [shape = 'u8[8192]{0}', space=vmem, size = 0x2000, scoped, tag = 'output window, operand 1, single buffered']
    #allocation5 [shape = 's32[1]{0}', space=sflag, size = 0x4, scoped, tag = 'scoped memory for autoencoder_forward.1']
    %12 = vsyncpa [#allocation3], 0
    %13 = vsyncpa [#allocation5], 0
    // Predicated region
    $region2: #{autoencoder_forward.1} parent=1 // pred_check
      _
    $region3: #{autoencoder_forward.1} parent=1 // pred_check_branch
      %15 = sbr.rel (0) target = $region5
    $region4: #{autoencoder_forward.1} parent=1 // pred_region
      _
    $region5: #{autoencoder_forward.1} parent=1 // pred_fallthru
      _
    // Predicated region
    $region6: #{autoencoder_forward.1} parent=1 // pred_check
      _
    $region7: #{autoencoder_forward.1} parent=1 // pred_check_branch
      %17 = sbr.rel (0) target = $region9
    $region8: #{autoencoder_forward.1} parent=1 // pred_region
      _
    $region9: #{autoencoder_forward.1} parent=1 // pred_fallthru
      _
    // Predicated region
    $region10: #{autoencoder_forward.1} parent=1 // pred_check
      _
    $region11: #{autoencoder_forward.1} parent=1 // pred_check_branch
      %19 = sbr.rel (0) target = $region13
    $region12: #{autoencoder_forward.1} parent=1 // pred_region
      _
    $region13: #{autoencoder_forward.1} parent=1 // pred_fallthru
      _
    // Predicated region
    $region14: #{autoencoder_forward.1} parent=1 // pred_check
      _
    $region15: #{autoencoder_forward.1} parent=1 // pred_check_branch
      %21 = sbr.rel (0) target = $region17
    $region16: #{autoencoder_forward.1} parent=1 // pred_region
      _
    $region17: #{autoencoder_forward.1} parent=1 // pred_fallthru
      _
    // Predicated region
    $region18: #{autoencoder_forward.1} parent=1 // pred_check
      _
    $region19: #{autoencoder_forward.1} parent=1 // pred_check_branch
      %23 = sbr.rel (0) target = $region21
    $region20: #{autoencoder_forward.1} parent=1 // pred_region
      _
    $region21: #{autoencoder_forward.1} parent=1 // pred_fallthru
      _
    %v24 = vld [vmem:[%s0] sm:$0xff]
    %v25 = vld [vmem:[%s1] sm:$0xf]
    %v26 = vld [vmem:[%s1 + $0x4] sm:$0xf]
    %v27 = vld [vmem:[%s1 + $0x8] sm:$0xf]
    %v28 = vld [vmem:[%s1 + $0xc] sm:$0xf]
    %v29 = vld [vmem:[%s1 + $0x10] sm:$0xf]
    %v30 = vld [vmem:[%s1 + $0x14] sm:$0xf]
    %v31 = vld [vmem:[%s1 + $0x18] sm:$0xf]
    %v32 = vld [vmem:[%s1 + $0x1c] sm:$0xf]
    %v33 = vld [vmem:[%s1 + $0x20] sm:$0xf]
    %v34 = vld [vmem:[%s1 + $0x24] sm:$0xf]
    %v35 = vld [vmem:[%s1 + $0x28] sm:$0xf]
    %v36 = vld [vmem:[%s1 + $0x2c] sm:$0xf]
    %v37 = vld [vmem:[%s1 + $0x30] sm:$0xf]
    %v38 = vld [vmem:[%s1 + $0x34] sm:$0xf]
    %v39 = vld [vmem:[%s1 + $0x38] sm:$0xf]
    %v40 = vld [vmem:[%s1 + $0x3c] sm:$0xf]
    %v41 = vld [vmem:[%s1 + $0x40] sm:$0xf]
    %v42 = vld [vmem:[%s1 + $0x44] sm:$0xf]
    %v43 = vld [vmem:[%s1 + $0x48] sm:$0xf]
    %v44 = vld [vmem:[%s1 + $0x4c] sm:$0xf]
    %v45 = vld [vmem:[%s1 + $0x50] sm:$0xf]
    %v46 = vld [vmem:[%s1 + $0x54] sm:$0xf]
    %v47 = vld [vmem:[%s1 + $0x58] sm:$0xf]
    %v48 = vld [vmem:[%s1 + $0x5c] sm:$0xf]
    %v49 = vld [vmem:[%s1 + $0x60] sm:$0xf]
    %v50 = vld [vmem:[%s1 + $0x64] sm:$0xf]
    %v51 = vld [vmem:[%s1 + $0x68] sm:$0xf]
    %v52 = vld [vmem:[%s1 + $0x6c] sm:$0xf]
    %v53 = vld [vmem:[%s1 + $0x70] sm:$0xf]
    %v54 = vld [vmem:[%s1 + $0x74] sm:$0xf]
    %v55 = vld [vmem:[%s1 + $0x78] sm:$0xf]
    %v56 = vld [vmem:[%s1 + $0x7c] sm:$0xf]
    %v57 = vld [vmem:[%s2] sm:$0x1]
    %v59 = vperm.slane %v57, 0
    %v62 = vunpack.c.l.b16 %v24
    %v63 = vunpack.c.h.b16 %v24
    %v64 = vpack.c.b16 %v62, %v62
    %v65 = vpack.c.b16 %v63, %v63
    %v100 = vunpack.c.l.b16 %v25
    %v101 = vunpack.c.l.b16 %v26
    %v102 = vunpack.c.l.b16 %v27
    %v103 = vunpack.c.l.b16 %v28
    %v104 = vunpack.c.l.b16 %v29
    %v105 = vunpack.c.l.b16 %v30
    %v106 = vunpack.c.l.b16 %v31
    %v107 = vunpack.c.l.b16 %v32
    %v108 = vunpack.c.l.b16 %v33
    %v109 = vunpack.c.l.b16 %v34
    %v110 = vunpack.c.l.b16 %v35
    %v111 = vunpack.c.l.b16 %v36
    %v112 = vunpack.c.l.b16 %v37
    %v113 = vunpack.c.l.b16 %v38
    %v114 = vunpack.c.l.b16 %v39
    %v115 = vunpack.c.l.b16 %v40
    %v116 = vunpack.c.l.b16 %v41
    %v117 = vunpack.c.l.b16 %v42
    %v118 = vunpack.c.l.b16 %v43
    %v119 = vunpack.c.l.b16 %v44
    %v120 = vunpack.c.l.b16 %v45
    %v121 = vunpack.c.l.b16 %v46
    %v122 = vunpack.c.l.b16 %v47
    %v123 = vunpack.c.l.b16 %v48
    %v124 = vunpack.c.l.b16 %v49
    %v125 = vunpack.c.l.b16 %v50
    %v126 = vunpack.c.l.b16 %v51
    %v127 = vunpack.c.l.b16 %v52
    %v128 = vunpack.c.l.b16 %v53
    %v129 = vunpack.c.l.b16 %v54
    %v130 = vunpack.c.l.b16 %v55
    %v131 = vunpack.c.l.b16 %v56
    %v132 = vpack.c.b16 %v101, %v100
    %v133 = vpack.c.b16 %v103, %v102
    %v134 = vpack.c.b16 %v105, %v104
    %v135 = vpack.c.b16 %v107, %v106
    %v136 = vpack.c.b16 %v109, %v108
    %v137 = vpack.c.b16 %v111, %v110
    %v138 = vpack.c.b16 %v113, %v112
    %v139 = vpack.c.b16 %v115, %v114
    %v140 = vpack.c.b16 %v117, %v116
    %v141 = vpack.c.b16 %v119, %v118
    %v142 = vpack.c.b16 %v121, %v120
    %v143 = vpack.c.b16 %v123, %v122
    %v144 = vpack.c.b16 %v125, %v124
    %v145 = vpack.c.b16 %v127, %v126
    %v146 = vpack.c.b16 %v129, %v128
    %v147 = vpack.c.b16 %v131, %v130
    %164 = vmatpush.bf16.msra.mxu0 %v139
    %165 = vmatpush.bf16.msra.mxu0 %v138
    %166 = vmatpush.bf16.msra.mxu0 %v137
    %167 = vmatpush.bf16.msra.mxu0 %v136
    %168 = vmatpush.bf16.msra.mxu0 %v135
    %169 = vmatpush.bf16.msra.mxu0 %v134
    %170 = vmatpush.bf16.msra.mxu0 %v133
    %171 = vmatpush.bf16.msra.mxu0 %v132
    %172 = vmatmul.bf16.gmra.mxu0 %v64
    %v173 = vpop.f32.mrf.mxu0
    %v174 = vadd.f32 %v59, %v173
    %v175 = vpop.f32.mrf.mxu0
    %176 = vdwg.mxu0
    %177 = vmatpush.bf16.msra.mxu0 %v147
    %178 = vmatpush.bf16.msra.mxu0 %v146
    %179 = vmatpush.bf16.msra.mxu0 %v145
    %180 = vmatpush.bf16.msra.mxu0 %v144
    %181 = vmatpush.bf16.msra.mxu0 %v143
    %182 = vmatpush.bf16.msra.mxu0 %v142
    %183 = vmatpush.bf16.msra.mxu0 %v141
    %184 = vmatpush.bf16.msra.mxu0 %v140
    %185 = vmatmul.bf16.gmra.mxu0 %v65
    %v186 = vpop.f32.mrf.mxu0
    %v187 = vadd.f32 %v174, %v186
    %v188 = vpop.f32.mrf.mxu0
    %189 = vdwg.mxu0
    %190 = vst [vmem:[#allocation2] sm:$0xff] %v187
    %v191 = vpack.c.bf16 %v187, %v187
    %v192 = vld [vmem:[%s3] sm:$0xff]
    %v193 = vld [vmem:[%s3 + $0x8] sm:$0xff]
    %v194 = vld [vmem:[%s3 + $0x10] sm:$0xff]
    %v195 = vld [vmem:[%s3 + $0x18] sm:$0xff]
    %v196 = vld [vmem:[%s3 + $0x20] sm:$0xff]
    %v197 = vld [vmem:[%s3 + $0x28] sm:$0xff]
    %v198 = vld [vmem:[%s3 + $0x30] sm:$0xff]
    %v199 = vld [vmem:[%s3 + $0x38] sm:$0xff]
    %v200 = vld [vmem:[%s3 + $0x40] sm:$0xff]
    %v201 = vld [vmem:[%s3 + $0x48] sm:$0xff]
    %v202 = vld [vmem:[%s3 + $0x50] sm:$0xff]
    %v203 = vld [vmem:[%s3 + $0x58] sm:$0xff]
    %v204 = vld [vmem:[%s3 + $0x60] sm:$0xff]
    %v205 = vld [vmem:[%s3 + $0x68] sm:$0xff]
    %v206 = vld [vmem:[%s3 + $0x70] sm:$0xff]
    %v207 = vld [vmem:[%s3 + $0x78] sm:$0xff]
    %v208 = vld [vmem:[%s4] sm:$0x3]
    %v210 = vperm.slane %v208, 0
    %v211 = vperm.slane %v208, 1
    %v230 = vunpack.c.l.b16 %v192
    %v231 = vunpack.c.h.b16 %v192
    %v232 = vunpack.c.l.b16 %v193
    %v233 = vunpack.c.h.b16 %v193
    %v234 = vunpack.c.l.b16 %v194
    %v235 = vunpack.c.h.b16 %v194
    %v236 = vunpack.c.l.b16 %v195
    %v237 = vunpack.c.h.b16 %v195
    %v238 = vunpack.c.l.b16 %v196
    %v239 = vunpack.c.h.b16 %v196
    %v240 = vunpack.c.l.b16 %v197
    %v241 = vunpack.c.h.b16 %v197
    %v242 = vunpack.c.l.b16 %v198
    %v243 = vunpack.c.h.b16 %v198
    %v244 = vunpack.c.l.b16 %v199
    %v245 = vunpack.c.h.b16 %v199
    %v246 = vunpack.c.l.b16 %v200
    %v247 = vunpack.c.h.b16 %v200
    %v248 = vunpack.c.l.b16 %v201
    %v249 = vunpack.c.h.b16 %v201
    %v250 = vunpack.c.l.b16 %v202
    %v251 = vunpack.c.h.b16 %v202
    %v252 = vunpack.c.l.b16 %v203
    %v253 = vunpack.c.h.b16 %v203
    %v254 = vunpack.c.l.b16 %v204
    %v255 = vunpack.c.h.b16 %v204
    %v256 = vunpack.c.l.b16 %v205
    %v257 = vunpack.c.h.b16 %v205
    %v258 = vunpack.c.l.b16 %v206
    %v259 = vunpack.c.h.b16 %v206
    %v260 = vunpack.c.l.b16 %v207
    %v261 = vunpack.c.h.b16 %v207
    %v262 = vpack.c.b16 %v232, %v230
    %v263 = vpack.c.b16 %v233, %v231
    %v264 = vpack.c.b16 %v236, %v234
    %v265 = vpack.c.b16 %v237, %v235
    %v266 = vpack.c.b16 %v240, %v238
    %v267 = vpack.c.b16 %v241, %v239
    %v268 = vpack.c.b16 %v244, %v242
    %v269 = vpack.c.b16 %v245, %v243
    %v270 = vpack.c.b16 %v248, %v246
    %v271 = vpack.c.b16 %v249, %v247
    %v272 = vpack.c.b16 %v252, %v250
    %v273 = vpack.c.b16 %v253, %v251
    %v274 = vpack.c.b16 %v256, %v254
    %v275 = vpack.c.b16 %v257, %v255
    %v276 = vpack.c.b16 %v260, %v258
    %v277 = vpack.c.b16 %v261, %v259
    %294 = vmatpush.bf16.msra.mxu0 %v276
    %295 = vmatpush.bf16.msra.mxu0 %v274
    %296 = vmatpush.bf16.msra.mxu0 %v272
    %297 = vmatpush.bf16.msra.mxu0 %v270
    %298 = vmatpush.bf16.msra.mxu0 %v268
    %299 = vmatpush.bf16.msra.mxu0 %v266
    %300 = vmatpush.bf16.msra.mxu0 %v264
    %301 = vmatpush.bf16.msra.mxu0 %v262
    %302 = vmatmul.bf16.gmra.mxu0 %v191
    %v303 = vpop.f32.mrf.mxu0
    %v304 = vadd.f32 %v210, %v303
    %v305 = vpop.f32.mrf.mxu0
    %306 = vdwg.mxu0
    %307 = vmatpush.bf16.msra.mxu0 %v277
    %308 = vmatpush.bf16.msra.mxu0 %v275
    %309 = vmatpush.bf16.msra.mxu0 %v273
    %310 = vmatpush.bf16.msra.mxu0 %v271
    %311 = vmatpush.bf16.msra.mxu0 %v269
    %312 = vmatpush.bf16.msra.mxu0 %v267
    %313 = vmatpush.bf16.msra.mxu0 %v265
    %314 = vmatpush.bf16.msra.mxu0 %v263
    %315 = vmatmul.bf16.gmra.mxu0 %v191
    %v316 = vpop.f32.mrf.mxu0
    %v317 = vadd.f32 %v211, %v316
    %v318 = vpop.f32.mrf.mxu0
    %319 = vdwg.mxu0
    %320 = vst [vmem:[#allocation4] sm:$0xff] %v304
    %321 = vst [vmem:[#allocation4 + $0x8] sm:$0xff] %v317
    // Predicated region
    $region22: #{autoencoder_forward.1} parent=1 // pred_check
      _
    $region23: #{autoencoder_forward.1} parent=1 // pred_check_branch
      %323 = sbr.rel (0) target = $region25
    $region24: #{autoencoder_forward.1} parent=1 // pred_region
      %325 = vsyncadd [#allocation3], 0
      %s327 = sshll.u32 [#allocation2], 4
      %s328 = int_to_ptr.vmem [resolvable:$true] %s327
      %s329 = sshll.u32 %s5, 4
      %s330 = int_to_ptr.hbm [resolvable:$true] %s329
      %332 = dma.vmem_to_hbm [thread:$0]  %s328, 128, %s330, [#allocation3]
    $region25: #{autoencoder_forward.1} parent=1 // pred_fallthru
      _
    // Predicated region
    $region26: #{autoencoder_forward.1} parent=1 // pred_check
      _
    $region27: #{autoencoder_forward.1} parent=1 // pred_check_branch
      %334 = sbr.rel (0) target = $region29
    $region28: #{autoencoder_forward.1} parent=1 // pred_region
      %336 = vsyncadd [#allocation5], 0
      %s338 = sshll.u32 [#allocation4], 4
      %s339 = int_to_ptr.vmem [resolvable:$true] %s338
      %s340 = sshll.u32 %s6, 4
      %s341 = int_to_ptr.hbm [resolvable:$true] %s340
      %343 = dma.vmem_to_hbm [thread:$0]  %s339, 256, %s341, [#allocation5]
    $region29: #{autoencoder_forward.1} parent=1 // pred_fallthru
      _
    // Predicated region
    $region30: #{autoencoder_forward.1} parent=1 // pred_check
      _
    $region31: #{autoencoder_forward.1} parent=1 // pred_check_branch
      %345 = sbr.rel (0) target = $region33
    $region32: #{autoencoder_forward.1} parent=1 // pred_region
      %347 = dma.done [#allocation3], 128
    $region33: #{autoencoder_forward.1} parent=1 // pred_fallthru
      _
    // Predicated region
    $region34: #{autoencoder_forward.1} parent=1 // pred_check
      _
    $region35: #{autoencoder_forward.1} parent=1 // pred_check_branch
      %349 = sbr.rel (0) target = $region37
    $region36: #{autoencoder_forward.1} parent=1 // pred_region
      %351 = dma.done [#allocation5], 256
    $region37: #{autoencoder_forward.1} parent=1 // pred_fallthru
      _
    %352 = vsyncpa [#allocation3], 1
    %353 = vsyncpa [#allocation5], 1

</llo_original>
